<compile_context>
chip_gen: v5e
topology: v5e:2x2
jax: 0.10.0
libtpu: 0.0.40
codegen_flags: <defaults>
</compile_context>

<pallas_src>
import functools

import jax
import jax.numpy as jnp
from jax.experimental import pallas as pl
from jax.experimental.pallas import tpu as pltpu


_LANE = 128      # lane width: weight/bias/output feature dims padded to a multiple of this
_SUBLANE = 8     # sublane width: batch tile kept a multiple of this


def _round_up(n, m):
    return ((n + m - 1) // m) * m


def _mlp_kernel(*refs, num_layers: int):
    """Fused MLP forward on one (TB, feat) batch tile.

    refs layout: x, w0, b0, w1, b1, ..., w_last, b_last, o
      x : [TB, In]  (bf16)      w_i : [fi_p, fo_p]  (bf16)
      b_i : [1, fo_p] (f32)     o : [TB, Out_p]     (f32)
    All matmuls run on the MXU with bf16 inputs / f32 accumulation; bias-add and
    tanh are done in f32 on the VPU/EUP. Activations never leave VMEM/vregs.
    """
    x_ref = refs[0]
    o_ref = refs[-1]

    h = x_ref[...]                                   # bf16
    idx = 1
    for layer in range(num_layers):
        w = refs[idx][...]                           # bf16 [fi_p, fo_p]
        b = refs[idx + 1][...]                       # f32  [1, fo_p]
        acc = jnp.dot(h, w, preferred_element_type=jnp.float32) + b
        if layer < num_layers - 1:
            h = jnp.tanh(acc).astype(w.dtype)        # back to bf16 for next MXU pass
        else:
            o_ref[...] = acc.astype(o_ref.dtype)     # readout: no activation
        idx += 2


def prepare_feedforward_params(params, readout, weight_dtype=jnp.bfloat16):
    """One-time layout prep (hoisted out of the per-call path; cache the result).

    * Weights are stored pre-transposed as [in_features, out_features].
    * Output feature dims are zero-padded to a multiple of 128 lanes; each layer's
      input dim is padded to match the previous layer's padded output (zeros are
      semantics-preserving). The very first layer keeps the raw input_size rows so
      x never needs a padded HBM copy.
    * Weights are cast to bf16 for the MXU; biases stay f32.
    """
    layers = list(params) + [readout]
    prepared = []
    prev_out_p = layers[0][0].shape[0]               # raw input_size (unpadded)
    for w, b in layers:
        fi, fo = w.shape
        fo_p = _round_up(fo, _LANE)
        w_p = jnp.pad(w, ((0, prev_out_p - fi), (0, fo_p - fo))).astype(weight_dtype)
        b_p = jnp.pad(b.reshape(1, fo), ((0, 0), (0, fo_p - fo))).astype(jnp.float32)
        prepared.append((w_p, b_p))
        prev_out_p = fo_p
    return prepared


@functools.partial(jax.jit, static_argnames=("out_size", "block_b"))
def feedforward_apply(prepared, x, *, out_size, block_b=256):
    """Full Feedforward forward pass in one fused, batch-tiled Pallas kernel.

    prepared: output of prepare_feedforward_params (hidden layers + readout, last)
    x:        [B, input_size] f32   ->   returns [B, out_size] f32
    """
    B, in_dim = x.shape
    num_layers = len(prepared)
    out_p = prepared[-1][0].shape[1]

    tb = min(block_b, _round_up(B, _SUBLANE))        # batch tile (multiple of 8)
    grid = (pl.cdiv(B, tb),)

    x_bf16 = x.astype(prepared[0][0].dtype)

    inputs = [x_bf16]
    in_specs = [pl.BlockSpec((tb, in_dim), lambda i: (i, 0))]
    for w_p, b_p in prepared:
        in_specs.append(pl.BlockSpec(w_p.shape, lambda i: (0, 0)))   # resident
        in_specs.append(pl.BlockSpec(b_p.shape, lambda i: (0, 0)))   # resident
        inputs.append(w_p)
        inputs.append(b_p)
    out_specs = pl.BlockSpec((tb, out_p), lambda i: (i, 0))

    # Rough VMEM budget: resident weights/biases + double-buffered activation tiles.
    weight_bytes = sum(w.size * w.dtype.itemsize + b.size * b.dtype.itemsize
                       for w, b in prepared)
    act_bytes = 2 * 2 * tb * max(in_dim, out_p) * 4
    est = weight_bytes + act_bytes
    vmem_limit = None
    if est > 12 * 1024 * 1024:
        # Stay inside v7x's 64 MiB physical VMEM; beyond this, tile K/N instead.
        vmem_limit = min(64 * 1024 * 1024, 2 * est)

    y_p = pl.pallas_call(
        functools.partial(_mlp_kernel, num_layers=num_layers),
        out_shape=jax.ShapeDtypeStruct((B, out_p), jnp.float32),
        grid=grid,
        in_specs=in_specs,
        out_specs=out_specs,
        compiler_params=pltpu.CompilerParams(
            dimension_semantics=("parallel",),
            vmem_limit_bytes=vmem_limit,
        ),
    )(*inputs)

    return y_p[:, :out_size]


def init_feedforward_params(key, input_size, hidden_sizes, output_size):
    """Deterministic init mimicking torch.nn.Linear default (U(-1/sqrt(in), 1/sqrt(in))).

    Weights are stored as [in_features, out_features] (already transposed for x @ W).
    """
    layer_sizes = [input_size] + list(hidden_sizes)
    params = []
    for fan_in, fan_out in zip(layer_sizes[:-1], layer_sizes[1:]):
        key, kw, kb = jax.random.split(key, 3)
        bound = 1.0 / jnp.sqrt(fan_in)
        w = jax.random.uniform(kw, (fan_in, fan_out), jnp.float32, -bound, bound)
        b = jax.random.uniform(kb, (fan_out,), jnp.float32, -bound, bound)
        params.append((w, b))
    key, kw, kb = jax.random.split(key, 3)
    fan_in = hidden_sizes[-1]
    bound = 1.0 / jnp.sqrt(fan_in)
    w_out = jax.random.uniform(kw, (fan_in, output_size), jnp.float32, -bound, bound)
    b_out = jax.random.uniform(kb, (output_size,), jnp.float32, -bound, bound)
    return params, (w_out, b_out)


def feedforward_ref(params, readout, x):
    """Pure-JAX f32 reference for correctness checking."""
    for w, b in params:
        x = jnp.tanh(x @ w + b)
    w_out, b_out = readout
    return x @ w_out + b_out


if __name__ == "__main__":
    key = jax.random.PRNGKey(0)
    batch = 512                 # >= 128 rows so the MXU is actually occupied; grid=(2,)
    input_size = 16
    hidden_sizes = [64, 64]
    output_size = 4

    key, kx = jax.random.split(key)
    x = jax.random.normal(kx, (batch, input_size), jnp.float32)

    params, readout = init_feedforward_params(key, input_size, hidden_sizes, output_size)

    # One-time layout prep (pad + bf16 cast), reused across every forward call.
    prepared = jax.tree.map(jax.block_until_ready,
                            prepare_feedforward_params(params, readout))

    y = feedforward_apply(prepared, x, out_size=output_size, block_b=256)
    y = jax.block_until_ready(y)

    y_ref = feedforward_ref(params, readout, x)
    assert y.shape == (batch, output_size)
    # bf16 MXU inputs with f32 accumulation: relax tolerance vs. the f32 reference.
    assert jnp.allclose(y, y_ref, atol=2e-2, rtol=2e-2), (
        float(jnp.max(jnp.abs(y - y_ref))))

    print("KERNEL_OK")
</pallas_src>

<mosaic_0001>
module attributes {stable_mosaic.version = 11 : i64} {
  func.func @_mlp_kernel(%arg0: i32, %arg1: memref<256x16xbf16, #tpu.memory_space<vmem>>, %arg2: memref<16x128xbf16, #tpu.memory_space<vmem>>, %arg3: memref<1x128xf32, #tpu.memory_space<vmem>>, %arg4: memref<128x128xbf16, #tpu.memory_space<vmem>>, %arg5: memref<1x128xf32, #tpu.memory_space<vmem>>, %arg6: memref<128x128xbf16, #tpu.memory_space<vmem>>, %arg7: memref<1x128xf32, #tpu.memory_space<vmem>>, %arg8: memref<256x128xf32, #tpu.memory_space<vmem>>) attributes {dimension_semantics = [#tpu.dimension_semantics<parallel>], iteration_bounds = array<i64: 2>, scalar_prefetch = 0 : i64, scratch_operands = 0 : i64, tpu.core_type = #tpu.core_type<tc>, window_params = [{transform_indices = @transform_0, window_bounds = array<i64: 256, 16>}, {pipeline_mode = #tpu.pipeline_mode<synchronous>, transform_indices = @transform_1, window_bounds = array<i64: 16, 128>}, {pipeline_mode = #tpu.pipeline_mode<synchronous>, transform_indices = @transform_2, window_bounds = array<i64: 1, 128>}, {pipeline_mode = #tpu.pipeline_mode<synchronous>, transform_indices = @transform_3, window_bounds = array<i64: 128, 128>}, {pipeline_mode = #tpu.pipeline_mode<synchronous>, transform_indices = @transform_4, window_bounds = array<i64: 1, 128>}, {pipeline_mode = #tpu.pipeline_mode<synchronous>, transform_indices = @transform_5, window_bounds = array<i64: 128, 128>}, {pipeline_mode = #tpu.pipeline_mode<synchronous>, transform_indices = @transform_6, window_bounds = array<i64: 1, 128>}, {transform_indices = @transform_7, window_bounds = array<i64: 256, 128>}]} {
    %c0 = arith.constant 0 : index
    %c0_0 = arith.constant 0 : index
    %0 = vector.load %arg1[%c0, %c0_0] : memref<256x16xbf16, #tpu.memory_space<vmem>>, vector<256x16xbf16>
    %c0_1 = arith.constant 0 : index
    %c0_2 = arith.constant 0 : index
    %1 = vector.load %arg2[%c0_1, %c0_2] : memref<16x128xbf16, #tpu.memory_space<vmem>>, vector<16x128xbf16>
    %c0_3 = arith.constant 0 : index
    %c0_4 = arith.constant 0 : index
    %2 = vector.load %arg3[%c0_3, %c0_4] : memref<1x128xf32, #tpu.memory_space<vmem>>, vector<1x128xf32>
    %cst = arith.constant dense<0.000000e+00> : vector<256x128xf32>
    %3 = tpu.matmul %0, %1, %cst {dimension_numbers = #tpu.dot_dimension_numbers<[1], [0], [0], [1], [0, 0, 1, 1], [], []>} : vector<256x16xbf16>, vector<16x128xbf16>, vector<256x128xf32> -> vector<256x128xf32>
    %4 = vector.broadcast %2 : vector<1x128xf32> to vector<256x128xf32>
    %5 = arith.addf %3, %4 : vector<256x128xf32>
    %6 = math.tanh %5 : vector<256x128xf32>
    %7 = arith.truncf %6 : vector<256x128xf32> to vector<256x128xbf16>
    %c0_5 = arith.constant 0 : index
    %c0_6 = arith.constant 0 : index
    %8 = vector.load %arg4[%c0_5, %c0_6] : memref<128x128xbf16, #tpu.memory_space<vmem>>, vector<128x128xbf16>
    %c0_7 = arith.constant 0 : index
    %c0_8 = arith.constant 0 : index
    %9 = vector.load %arg5[%c0_7, %c0_8] : memref<1x128xf32, #tpu.memory_space<vmem>>, vector<1x128xf32>
    %cst_9 = arith.constant dense<0.000000e+00> : vector<256x128xf32>
    %10 = tpu.matmul %7, %8, %cst_9 {dimension_numbers = #tpu.dot_dimension_numbers<[1], [0], [0], [1], [0, 0, 1, 1], [], []>} : vector<256x128xbf16>, vector<128x128xbf16>, vector<256x128xf32> -> vector<256x128xf32>
    %11 = vector.broadcast %9 : vector<1x128xf32> to vector<256x128xf32>
    %12 = arith.addf %10, %11 : vector<256x128xf32>
    %13 = math.tanh %12 : vector<256x128xf32>
    %14 = arith.truncf %13 : vector<256x128xf32> to vector<256x128xbf16>
    %c0_10 = arith.constant 0 : index
    %c0_11 = arith.constant 0 : index
    %15 = vector.load %arg6[%c0_10, %c0_11] : memref<128x128xbf16, #tpu.memory_space<vmem>>, vector<128x128xbf16>
    %c0_12 = arith.constant 0 : index
    %c0_13 = arith.constant 0 : index
    %16 = vector.load %arg7[%c0_12, %c0_13] : memref<1x128xf32, #tpu.memory_space<vmem>>, vector<1x128xf32>
    %cst_14 = arith.constant dense<0.000000e+00> : vector<256x128xf32>
    %17 = tpu.matmul %14, %15, %cst_14 {dimension_numbers = #tpu.dot_dimension_numbers<[1], [0], [0], [1], [0, 0, 1, 1], [], []>} : vector<256x128xbf16>, vector<128x128xbf16>, vector<256x128xf32> -> vector<256x128xf32>
    %18 = vector.broadcast %16 : vector<1x128xf32> to vector<256x128xf32>
    %19 = arith.addf %17, %18 : vector<256x128xf32>
    %c0_15 = arith.constant 0 : index
    %c0_16 = arith.constant 0 : index
    %20 = vector.load %arg8[%c0_15, %c0_16] : memref<256x128xf32, #tpu.memory_space<vmem>>, vector<256x128xf32>
    tpu.vector_store %arg8[%c0_15, %c0_16], %19 {strides = array<i32>} : memref<256x128xf32, #tpu.memory_space<vmem>>, vector<256x128xf32>,
    return
  }
  func.func @transform_0(%arg0: i32) -> (i32, i32) {
    %c0_i32 = arith.constant 0 : i32
    %c0_i32_0 = arith.constant 0 : i32
    return %arg0, %c0_i32 : i32, i32
  }
  func.func @transform_1(%arg0: i32) -> (i32, i32) {
    %c0_i32 = arith.constant 0 : i32
    %c0_i32_0 = arith.constant 0 : i32
    %c0_i32_1 = arith.constant 0 : i32
    return %c0_i32, %c0_i32_0 : i32, i32
  }
  func.func @transform_2(%arg0: i32) -> (i32, i32) {
    %c0_i32 = arith.constant 0 : i32
    %c0_i32_0 = arith.constant 0 : i32
    %c0_i32_1 = arith.constant 0 : i32
    return %c0_i32, %c0_i32_0 : i32, i32
  }
  func.func @transform_3(%arg0: i32) -> (i32, i32) {
    %c0_i32 = arith.constant 0 : i32
    %c0_i32_0 = arith.constant 0 : i32
    %c0_i32_1 = arith.constant 0 : i32
    return %c0_i32, %c0_i32_0 : i32, i32
  }
  func.func @transform_4(%arg0: i32) -> (i32, i32) {
    %c0_i32 = arith.constant 0 : i32
    %c0_i32_0 = arith.constant 0 : i32
    %c0_i32_1 = arith.constant 0 : i32
    return %c0_i32, %c0_i32_0 : i32, i32
  }
  func.func @transform_5(%arg0: i32) -> (i32, i32) {
    %c0_i32 = arith.constant 0 : i32
    %c0_i32_0 = arith.constant 0 : i32
    %c0_i32_1 = arith.constant 0 : i32
    return %c0_i32, %c0_i32_0 : i32, i32
  }
  func.func @transform_6(%arg0: i32) -> (i32, i32) {
    %c0_i32 = arith.constant 0 : i32
    %c0_i32_0 = arith.constant 0 : i32
    %c0_i32_1 = arith.constant 0 : i32
    return %c0_i32, %c0_i32_0 : i32, i32
  }
  func.func @transform_7(%arg0: i32) -> (i32, i32) {
    %c0_i32 = arith.constant 0 : i32
    %c0_i32_0 = arith.constant 0 : i32
    return %arg0, %c0_i32 : i32, i32
  }
}

</mosaic_0001>

<llo_original>
// kernel: feedforward_apply.1
$region0: #{feedforward_apply.1}
  #allocation0 [shape = 'u32[]', space=smem, size = 0x4, offset = 0x4, fixed_abs, tag = 'smem constant byte address 0x4 - core index']
  #allocation1 [shape = 'u32[72,128]{1,0:T(1,128)}', space=vmem, size = 0x9000, scoped, tag = 'internal scratch']
  %s0 = inlined_call_operand.vmem [shape: bf16[512,16], index: 0, kind: input, shape index: {}]
  %s1 = inlined_call_operand.vmem [shape: bf16[16,128], index: 1, kind: input, shape index: {}]
  %s2 = inlined_call_operand.vmem [shape: f32[1,128], index: 2, kind: input, shape index: {}]
  %s3 = inlined_call_operand.vmem [shape: bf16[128,128], index: 3, kind: input, shape index: {}]
  %s4 = inlined_call_operand.vmem [shape: f32[1,128], index: 4, kind: input, shape index: {}]
  %s5 = inlined_call_operand.vmem [shape: bf16[128,128], index: 5, kind: input, shape index: {}]
  %s6 = inlined_call_operand.vmem [shape: f32[1,128], index: 6, kind: input, shape index: {}]
  %s7 = inlined_call_operand.vmem [shape: f32[512,128], index: 7, kind: output, shape index: {}]
  %s8 = sld [smem:[#allocation0]]
  $region61: #{feedforward_apply.1} parent=0
    _
  %s10 = ssub.s32 1, %s8
  %s11 = scalar_select 0, %s10, %s8
  loop: start=0, step=1, limit=4
  $region2: #{feedforward_apply.1} parent=0 // loop_pre_header
    _
  $region3: #{feedforward_apply.1} parent=0 // loop_header
    %s13 = sphi 0, %s17
    %p14 = scmp.ge.s32.totalorder %s13, 4
    %s23 = sphi 0, %s25
    %s26 = sphi 0, %s23
    %s27 = sphi 0, %s26
    %s43 = sphi 0, %s27
    %s47 = sphi 0, %s47
    %s49 = sphi 0, %s47
    %s50 = sphi 0, %s49
    %s64 = sphi 0, %s50
    %s68 = sphi 0, %s68
    %s70 = sphi 0, %s68
    %s71 = sphi 0, %s70
    %s85 = sphi 0, %s71
    %s89 = sphi 0, %s89
    %s91 = sphi 0, %s89
    %s92 = sphi 0, %s91
    %s106 = sphi 0, %s92
    %s110 = sphi 0, %s110
    %s112 = sphi 0, %s110
    %s113 = sphi 0, %s112
    %s127 = sphi 0, %s113
    %s131 = sphi 0, %s131
    %s133 = sphi 0, %s131
    %s134 = sphi 0, %s133
    %s148 = sphi 0, %s134
    %s152 = sphi 0, %s152
    %s154 = sphi 0, %s152
    %s155 = sphi 0, %s154
    %s169 = sphi 0, %s155
    %s175 = sphi 0, %s177
    %s178 = sphi 0, %s175
    %s179 = sphi 0, %s178
    %s195 = sphi 0, %s179
  $region4: #{feedforward_apply.1} parent=0 // loop_header_branch
    %16 = sbr.rel (%p14) target = $region8
  $region5: #{feedforward_apply.1} parent=0 // loop_body
    %s18 = ssub.s32 %s13, 1
    %s19 = ssub.s32 %s13, 2
    %s20 = sadd.s32 %s13, 1
    %s21 = ssub.s32 %s13, %s20
    %p22 = scmp.eq.s32.totalorder %s21, 0
    %s24 = sadd.s32 %s23, 1
    %s25 = scalar_select %p22, %s23, %s24
    %p28 = pneg %p22
    %p29 = scmp.eq.s32.totalorder %s13, 1
    %p30 = por %p28, %p29
    %p31 = scmp.ne.s32.totalorder %s23, %s26
    %p32 = scmp.eq.s32.totalorder %s13, 0
    %p33 = por %p31, %p32
    %p34 = scmp.ne.s32.totalorder %s23, %s26
    %p35 = scmp.eq.s32.totalorder %s18, 1
    %p36 = por %p34, %p35
    %p37 = scmp.ne.s32.totalorder %s26, %s27
    %p38 = scmp.eq.s32.totalorder %s18, 0
    %p39 = por %p37, %p38
    %p40 = scmp.ne.s32.totalorder %s26, %s27
    %p41 = scmp.eq.s32.totalorder %s19, 1
    %p42 = por %p40, %p41
    %p44 = scmp.ne.s32.totalorder %s27, %s43
    %p45 = scmp.eq.s32.totalorder %s19, 0
    %p46 = por %p44, %p45
    %s48 = sadd.s32 %s47, 1
    %p51 = scmp.eq.s32.totalorder %s13, 1
    %p52 = scmp.ne.s32.totalorder %s47, %s49
    %p53 = scmp.eq.s32.totalorder %s13, 0
    %p54 = por %p52, %p53
    %p55 = scmp.ne.s32.totalorder %s47, %s49
    %p56 = scmp.eq.s32.totalorder %s18, 1
    %p57 = por %p55, %p56
    %p58 = scmp.ne.s32.totalorder %s49, %s50
    %p59 = scmp.eq.s32.totalorder %s18, 0
    %p60 = por %p58, %p59
    %p61 = scmp.ne.s32.totalorder %s49, %s50
    %p62 = scmp.eq.s32.totalorder %s19, 1
    %p63 = por %p61, %p62
    %p65 = scmp.ne.s32.totalorder %s50, %s64
    %p66 = scmp.eq.s32.totalorder %s19, 0
    %p67 = por %p65, %p66
    %s69 = sadd.s32 %s68, 1
    %p72 = scmp.eq.s32.totalorder %s13, 1
    %p73 = scmp.ne.s32.totalorder %s68, %s70
    %p74 = scmp.eq.s32.totalorder %s13, 0
    %p75 = por %p73, %p74
    %p76 = scmp.ne.s32.totalorder %s68, %s70
    %p77 = scmp.eq.s32.totalorder %s18, 1
    %p78 = por %p76, %p77
    %p79 = scmp.ne.s32.totalorder %s70, %s71
    %p80 = scmp.eq.s32.totalorder %s18, 0
    %p81 = por %p79, %p80
    %p82 = scmp.ne.s32.totalorder %s70, %s71
    %p83 = scmp.eq.s32.totalorder %s19, 1
    %p84 = por %p82, %p83
    %p86 = scmp.ne.s32.totalorder %s71, %s85
    %p87 = scmp.eq.s32.totalorder %s19, 0
    %p88 = por %p86, %p87
    %s90 = sadd.s32 %s89, 1
    %p93 = scmp.eq.s32.totalorder %s13, 1
    %p94 = scmp.ne.s32.totalorder %s89, %s91
    %p95 = scmp.eq.s32.totalorder %s13, 0
    %p96 = por %p94, %p95
    %p97 = scmp.ne.s32.totalorder %s89, %s91
    %p98 = scmp.eq.s32.totalorder %s18, 1
    %p99 = por %p97, %p98
    %p100 = scmp.ne.s32.totalorder %s91, %s92
    %p101 = scmp.eq.s32.totalorder %s18, 0
    %p102 = por %p100, %p101
    %p103 = scmp.ne.s32.totalorder %s91, %s92
    %p104 = scmp.eq.s32.totalorder %s19, 1
    %p105 = por %p103, %p104
    %p107 = scmp.ne.s32.totalorder %s92, %s106
    %p108 = scmp.eq.s32.totalorder %s19, 0
    %p109 = por %p107, %p108
    %s111 = sadd.s32 %s110, 1
    %p114 = scmp.eq.s32.totalorder %s13, 1
    %p115 = scmp.ne.s32.totalorder %s110, %s112
    %p116 = scmp.eq.s32.totalorder %s13, 0
    %p117 = por %p115, %p116
    %p118 = scmp.ne.s32.totalorder %s110, %s112
    %p119 = scmp.eq.s32.totalorder %s18, 1
    %p120 = por %p118, %p119
    %p121 = scmp.ne.s32.totalorder %s112, %s113
    %p122 = scmp.eq.s32.totalorder %s18, 0
    %p123 = por %p121, %p122
    %p124 = scmp.ne.s32.totalorder %s112, %s113
    %p125 = scmp.eq.s32.totalorder %s19, 1
    %p126 = por %p124, %p125
    %p128 = scmp.ne.s32.totalorder %s113, %s127
    %p129 = scmp.eq.s32.totalorder %s19, 0
    %p130 = por %p128, %p129
    %s132 = sadd.s32 %s131, 1
    %p135 = scmp.eq.s32.totalorder %s13, 1
    %p136 = scmp.ne.s32.totalorder %s131, %s133
    %p137 = scmp.eq.s32.totalorder %s13, 0
    %p138 = por %p136, %p137
    %p139 = scmp.ne.s32.totalorder %s131, %s133
    %p140 = scmp.eq.s32.totalorder %s18, 1
    %p141 = por %p139, %p140
    %p142 = scmp.ne.s32.totalorder %s133, %s134
    %p143 = scmp.eq.s32.totalorder %s18, 0
    %p144 = por %p142, %p143
    %p145 = scmp.ne.s32.totalorder %s133, %s134
    %p146 = scmp.eq.s32.totalorder %s19, 1
    %p147 = por %p145, %p146
    %p149 = scmp.ne.s32.totalorder %s134, %s148
    %p150 = scmp.eq.s32.totalorder %s19, 0
    %p151 = por %p149, %p150
    %s153 = sadd.s32 %s152, 1
    %p156 = scmp.eq.s32.totalorder %s13, 1
    %p157 = scmp.ne.s32.totalorder %s152, %s154
    %p158 = scmp.eq.s32.totalorder %s13, 0
    %p159 = por %p157, %p158
    %p160 = scmp.ne.s32.totalorder %s152, %s154
    %p161 = scmp.eq.s32.totalorder %s18, 1
    %p162 = por %p160, %p161
    %p163 = scmp.ne.s32.totalorder %s154, %s155
    %p164 = scmp.eq.s32.totalorder %s18, 0
    %p165 = por %p163, %p164
    %p166 = scmp.ne.s32.totalorder %s154, %s155
    %p167 = scmp.eq.s32.totalorder %s19, 1
    %p168 = por %p166, %p167
    %p170 = scmp.ne.s32.totalorder %s155, %s169
    %p171 = scmp.eq.s32.totalorder %s19, 0
    %p172 = por %p170, %p171
    %s173 = ssub.s32 %s13, %s20
    %p174 = scmp.eq.s32.totalorder %s173, 0
    %s176 = sadd.s32 %s175, 1
    %s177 = scalar_select %p174, %s175, %s176
    %p180 = pneg %p174
    %p181 = scmp.eq.s32.totalorder %s13, 1
    %p182 = por %p180, %p181
    %p183 = scmp.ne.s32.totalorder %s175, %s178
    %p184 = scmp.eq.s32.totalorder %s13, 0
    %p185 = por %p183, %p184
    %p186 = scmp.ne.s32.totalorder %s175, %s178
    %p187 = scmp.eq.s32.totalorder %s18, 1
    %p188 = por %p186, %p187
    %p189 = scmp.ne.s32.totalorder %s178, %s179
    %p190 = scmp.eq.s32.totalorder %s18, 0
    %p191 = por %p189, %p190
    %p192 = scmp.ne.s32.totalorder %s178, %s179
    %p193 = scmp.eq.s32.totalorder %s19, 1
    %p194 = por %p192, %p193
    %p196 = scmp.ne.s32.totalorder %s179, %s195
    %p197 = scmp.eq.s32.totalorder %s19, 0
    %p198 = por %p196, %p197
    %p199 = scmp.le.s32.totalorder 1, %s13
    %p200 = scmp.lt.s32.totalorder %s13, 3
    %p201 = pnand %p199, %p200
    %p202 = pneg %p201
    // Predicated region
    $region9: #{feedforward_apply.1} parent=5 // pred_check
      _
    $region10: #{feedforward_apply.1} parent=5 // pred_check_branch
      %204 = sbr.rel (%p201) target = $region12
    $region11: #{feedforward_apply.1} parent=5 // pred_region
      %s205 = ssub.s32 %s13, 1
      // Predicated region
      $region13: #{feedforward_apply.1} parent=11 // pred_check
        %p206 = pneg %p60
      $region14: #{feedforward_apply.1} parent=11 // pred_check_branch
        %208 = sbr.rel (%p206) target = $region16
      $region15: #{feedforward_apply.1} parent=11 // pred_region
        _
      $region16: #{feedforward_apply.1} parent=11 // pred_fallthru
        _
      // Predicated region
      $region17: #{feedforward_apply.1} parent=11 // pred_check
        %p209 = pneg %p81
      $region18: #{feedforward_apply.1} parent=11 // pred_check_branch
        %211 = sbr.rel (%p209) target = $region20
      $region19: #{feedforward_apply.1} parent=11 // pred_region
        _
      $region20: #{feedforward_apply.1} parent=11 // pred_fallthru
        _
      // Predicated region
      $region21: #{feedforward_apply.1} parent=11 // pred_check
        %p212 = pneg %p102
      $region22: #{feedforward_apply.1} parent=11 // pred_check_branch
        %214 = sbr.rel (%p212) target = $region24
      $region23: #{feedforward_apply.1} parent=11 // pred_region
        _
      $region24: #{feedforward_apply.1} parent=11 // pred_fallthru
        _
      // Predicated region
      $region25: #{feedforward_apply.1} parent=11 // pred_check
        %p215 = pneg %p123
      $region26: #{feedforward_apply.1} parent=11 // pred_check_branch
        %217 = sbr.rel (%p215) target = $region28
      $region27: #{feedforward_apply.1} parent=11 // pred_region
        _
      $region28: #{feedforward_apply.1} parent=11 // pred_fallthru
        _
      // Predicated region
      $region29: #{feedforward_apply.1} parent=11 // pred_check
        %p218 = pneg %p144
      $region30: #{feedforward_apply.1} parent=11 // pred_check_branch
        %220 = sbr.rel (%p218) target = $region32
      $region31: #{feedforward_apply.1} parent=11 // pred_region
        _
      $region32: #{feedforward_apply.1} parent=11 // pred_fallthru
        _
      // Predicated region
      $region33: #{feedforward_apply.1} parent=11 // pred_check
        %p221 = pneg %p165
      $region34: #{feedforward_apply.1} parent=11 // pred_check_branch
        %223 = sbr.rel (%p221) target = $region36
      $region35: #{feedforward_apply.1} parent=11 // pred_region
        _
      $region36: #{feedforward_apply.1} parent=11 // pred_fallthru
        _
    $region12: #{feedforward_apply.1} parent=5 // pred_fallthru
      _
    %p224 = scmp.lt.s32.totalorder %s13, 2
    // Predicated region
    $region37: #{feedforward_apply.1} parent=5 // pred_check
      %p225 = pneg %p224
    $region38: #{feedforward_apply.1} parent=5 // pred_check_branch
      %227 = sbr.rel (%p225) target = $region40
    $region39: #{feedforward_apply.1} parent=5 // pred_region
      // Predicated region
      $region41: #{feedforward_apply.1} parent=39 // pred_check
        %p228 = pneg %p33
      $region42: #{feedforward_apply.1} parent=39 // pred_check_branch
        %230 = sbr.rel (%p228) target = $region44
      $region43: #{feedforward_apply.1} parent=39 // pred_region
        %s231 = smul.u32 32, %s13
        %p232 = scmp.lt.s32.totalorder %s231, 63
        %s233 = scalar_select %p232, %s231, 63
        %s234 = smul.addr %s233, 4
        %s235 = scalar_lea.vmem %s0, %s234
        %s236 = smul.u32 32, %s13
      $region44: #{feedforward_apply.1} parent=39 // pred_fallthru
        _
    $region40: #{feedforward_apply.1} parent=5 // pred_fallthru
      _
    %p237 = scmp.le.s32.totalorder 1, %s13
    %p238 = scmp.lt.s32.totalorder %s13, 3
    %p239 = pnand %p237, %p238
    %p240 = pneg %p239
    // Predicated region
    $region45: #{feedforward_apply.1} parent=5 // pred_check
      _
    $region46: #{feedforward_apply.1} parent=5 // pred_check_branch
      %242 = sbr.rel (%p239) target = $region48
    $region47: #{feedforward_apply.1} parent=5 // pred_region
      %s243 = ssub.s32 %s13, 1
      %s244 = smul.u32 32, %s18
      %p245 = scmp.lt.s32.totalorder %s244, 63
      %s246 = scalar_select %p245, %s244, 63
      %s247 = smul.addr %s246, 4
      %s248 = scalar_lea.vmem %s0, %s247
      %p249 = pneg %p39
      %p250 = pneg %p36
      %p251 = pneg %p60
      %p252 = pneg %p57
      %p253 = pneg %p81
      %p254 = pneg %p78
      %p255 = pneg %p102
      %p256 = pneg %p99
      %p257 = pneg %p123
      %p258 = pneg %p120
      %p259 = pneg %p144
      %p260 = pneg %p141
      %p261 = pneg %p165
      %p262 = pneg %p162
      %p263 = pneg %p191
      %p264 = pneg %p188
      %s265 = smul.u32 32, %s18
      %p266 = scmp.lt.s32.totalorder %s265, 63
      %s267 = scalar_select %p266, %s265, 63
      %s268 = smul.addr %s267, 8
      %s269 = scalar_lea.vmem %s7, %s268
      %s270 = smul.u32 32, %s18
      %p271 = scmp.lt.s32.totalorder %s270, 63
      %s272 = scalar_select %p271, %s270, 63
      %s273 = smul.addr %s272, 4
      %s274 = scalar_lea.vmem %s0, %s273
      %s275 = smul.u32 32, %s18
      %s276 = smul.u32 32, %s18
      %p277 = scmp.lt.s32.totalorder %s276, 63
      %s278 = scalar_select %p277, %s276, 63
      %s279 = smul.addr %s278, 8
      %s280 = scalar_lea.vmem %s7, %s279
      %s281 = smul.u32 32, %s18
      %v283 = vld [vmem:[%s274] sm:$0xf]
      %v284 = vld [vmem:[%s274 + $0x4] sm:$0xf]
      %v285 = vld [vmem:[%s274 + $0x8] sm:$0xf]
      %v286 = vld [vmem:[%s274 + $0xc] sm:$0xf]
      %v287 = vld [vmem:[%s274 + $0x10] sm:$0xf]
      %v288 = vld [vmem:[%s274 + $0x14] sm:$0xf]
      %v289 = vld [vmem:[%s274 + $0x18] sm:$0xf]
      %v290 = vld [vmem:[%s274 + $0x1c] sm:$0xf]
      %v291 = vld [vmem:[%s274 + $0x20] sm:$0xf]
      %v292 = vld [vmem:[%s274 + $0x24] sm:$0xf]
      %v293 = vld [vmem:[%s274 + $0x28] sm:$0xf]
      %v294 = vld [vmem:[%s274 + $0x2c] sm:$0xf]
      %v295 = vld [vmem:[%s274 + $0x30] sm:$0xf]
      %v296 = vld [vmem:[%s274 + $0x34] sm:$0xf]
      %v297 = vld [vmem:[%s274 + $0x38] sm:$0xf]
      %v298 = vld [vmem:[%s274 + $0x3c] sm:$0xf]
      %v299 = vld [vmem:[%s274 + $0x40] sm:$0xf]
      %v300 = vld [vmem:[%s274 + $0x44] sm:$0xf]
      %v301 = vld [vmem:[%s274 + $0x48] sm:$0xf]
      %v302 = vld [vmem:[%s274 + $0x4c] sm:$0xf]
      %v303 = vld [vmem:[%s274 + $0x50] sm:$0xf]
      %v304 = vld [vmem:[%s274 + $0x54] sm:$0xf]
      %v305 = vld [vmem:[%s274 + $0x58] sm:$0xf]
      %v306 = vld [vmem:[%s274 + $0x5c] sm:$0xf]
      %v307 = vld [vmem:[%s274 + $0x60] sm:$0xf]
      %v308 = vld [vmem:[%s274 + $0x64] sm:$0xf]
      %v309 = vld [vmem:[%s274 + $0x68] sm:$0xf]
      %v310 = vld [vmem:[%s274 + $0x6c] sm:$0xf]
      %v311 = vld [vmem:[%s274 + $0x70] sm:$0xf]
      %v312 = vld [vmem:[%s274 + $0x74] sm:$0xf]
      %v313 = vld [vmem:[%s274 + $0x78] sm:$0xf]
      %v314 = vld [vmem:[%s274 + $0x7c] sm:$0xf]
      %v315 = vld [vmem:[%s1] sm:$0xf]
      %v316 = vld [vmem:[%s1 + $0x4] sm:$0xf]
      %v317 = vld [vmem:[%s2] sm:$0x1]
      %v319 = vperm.slane %v317, 0
      %v353 = vunpack.c.l.b16 %v283
      %v354 = vunpack.c.l.b16 %v284
      %v355 = vunpack.c.l.b16 %v285
      %v356 = vunpack.c.l.b16 %v286
      %v357 = vunpack.c.l.b16 %v287
      %v358 = vunpack.c.l.b16 %v288
      %v359 = vunpack.c.l.b16 %v289
      %v360 = vunpack.c.l.b16 %v290
      %v361 = vunpack.c.l.b16 %v291
      %v362 = vunpack.c.l.b16 %v292
      %v363 = vunpack.c.l.b16 %v293
      %v364 = vunpack.c.l.b16 %v294
      %v365 = vunpack.c.l.b16 %v295
      %v366 = vunpack.c.l.b16 %v296
      %v367 = vunpack.c.l.b16 %v297
      %v368 = vunpack.c.l.b16 %v298
      %v369 = vunpack.c.l.b16 %v299
      %v370 = vunpack.c.l.b16 %v300
      %v371 = vunpack.c.l.b16 %v301
      %v372 = vunpack.c.l.b16 %v302
      %v373 = vunpack.c.l.b16 %v303
      %v374 = vunpack.c.l.b16 %v304
      %v375 = vunpack.c.l.b16 %v305
      %v376 = vunpack.c.l.b16 %v306
      %v377 = vunpack.c.l.b16 %v307
      %v378 = vunpack.c.l.b16 %v308
      %v379 = vunpack.c.l.b16 %v309
      %v380 = vunpack.c.l.b16 %v310
      %v381 = vunpack.c.l.b16 %v311
      %v382 = vunpack.c.l.b16 %v312
      %v383 = vunpack.c.l.b16 %v313
      %v384 = vunpack.c.l.b16 %v314
      %v385 = vpack.c.b16 %v354, %v353
      %v386 = vpack.c.b16 %v356, %v355
      %v387 = vpack.c.b16 %v358, %v357
      %v388 = vpack.c.b16 %v360, %v359
      %v389 = vpack.c.b16 %v362, %v361
      %v390 = vpack.c.b16 %v364, %v363
      %v391 = vpack.c.b16 %v366, %v365
      %v392 = vpack.c.b16 %v368, %v367
      %v393 = vpack.c.b16 %v370, %v369
      %v394 = vpack.c.b16 %v372, %v371
      %v395 = vpack.c.b16 %v374, %v373
      %v396 = vpack.c.b16 %v376, %v375
      %v397 = vpack.c.b16 %v378, %v377
      %v398 = vpack.c.b16 %v380, %v379
      %v399 = vpack.c.b16 %v382, %v381
      %v400 = vpack.c.b16 %v384, %v383
      %v403 = vunpack.c.l.b16 %v315
      %v404 = vunpack.c.l.b16 %v316
      %v405 = vpack.c.b16 %v404, %v403
      %vm407 = vcmask 130048
      %v409 = vsel %vm407, %v385, 0
      %v412 = vsel %vm407, %v386, 0
      %v415 = vsel %vm407, %v387, 0
      %v418 = vsel %vm407, %v388, 0
      %v421 = vsel %vm407, %v389, 0
      %v424 = vsel %vm407, %v390, 0
      %v427 = vsel %vm407, %v391, 0
      %v430 = vsel %vm407, %v392, 0
      %v433 = vsel %vm407, %v393, 0
      %v436 = vsel %vm407, %v394, 0
      %v439 = vsel %vm407, %v395, 0
      %v442 = vsel %vm407, %v396, 0
      %v445 = vsel %vm407, %v397, 0
      %v448 = vsel %vm407, %v398, 0
      %v451 = vsel %vm407, %v399, 0
      %v454 = vsel %vm407, %v400, 0
      %456 = vmatpush.bf16.msra.mxu0 0
      %457 = vmatpush.bf16.msra.mxu0 0
      %458 = vmatpush.bf16.msra.mxu0 0
      %459 = vmatpush.bf16.msra.mxu0 0
      %460 = vmatpush.bf16.msra.mxu0 0
      %461 = vmatpush.bf16.msra.mxu0 0
      %462 = vmatpush.bf16.msra.mxu0 0
      %463 = vmatpush.bf16.msra.mxu0 %v405
      %464 = vmatmul.bf16.gmra.mxu0 %v409
      %v465 = vpop.f32.mrf.mxu0
      %v466 = vadd.f32 %v319, %v465
      %v467 = vpop.f32.mrf.mxu0
      %v468 = vadd.f32 %v319, %v467
      %469 = vmatmul.bf16.gmra.mxu0 %v412
      %v470 = vpop.f32.mrf.mxu0
      %v471 = vadd.f32 %v319, %v470
      %v472 = vpop.f32.mrf.mxu0
      %v473 = vadd.f32 %v319, %v472
      %474 = vmatmul.bf16.gmra.mxu0 %v415
      %v475 = vpop.f32.mrf.mxu0
      %v476 = vadd.f32 %v319, %v475
      %v477 = vpop.f32.mrf.mxu0
      %v478 = vadd.f32 %v319, %v477
      %479 = vmatmul.bf16.gmra.mxu0 %v418
      %v480 = vpop.f32.mrf.mxu0
      %v481 = vadd.f32 %v319, %v480
      %v482 = vpop.f32.mrf.mxu0
      %v483 = vadd.f32 %v319, %v482
      %484 = vmatmul.bf16.gmra.mxu0 %v421
      %v485 = vpop.f32.mrf.mxu0
      %v486 = vadd.f32 %v319, %v485
      %v487 = vpop.f32.mrf.mxu0
      %v488 = vadd.f32 %v319, %v487
      %489 = vmatmul.bf16.gmra.mxu0 %v424
      %v490 = vpop.f32.mrf.mxu0
      %v491 = vadd.f32 %v319, %v490
      %v492 = vpop.f32.mrf.mxu0
      %v493 = vadd.f32 %v319, %v492
      %494 = vmatmul.bf16.gmra.mxu0 %v427
      %v495 = vpop.f32.mrf.mxu0
      %v496 = vadd.f32 %v319, %v495
      %v497 = vpop.f32.mrf.mxu0
      %v498 = vadd.f32 %v319, %v497
      %499 = vmatmul.bf16.gmra.mxu0 %v430
      %v500 = vpop.f32.mrf.mxu0
      %v501 = vadd.f32 %v319, %v500
      %v502 = vpop.f32.mrf.mxu0
      %v503 = vadd.f32 %v319, %v502
      %504 = vmatmul.bf16.gmra.mxu0 %v433
      %v505 = vpop.f32.mrf.mxu0
      %v506 = vadd.f32 %v319, %v505
      %v507 = vpop.f32.mrf.mxu0
      %v508 = vadd.f32 %v319, %v507
      %509 = vmatmul.bf16.gmra.mxu0 %v436
      %v510 = vpop.f32.mrf.mxu0
      %v511 = vadd.f32 %v319, %v510
      %v512 = vpop.f32.mrf.mxu0
      %v513 = vadd.f32 %v319, %v512
      %514 = vmatmul.bf16.gmra.mxu0 %v439
      %v515 = vpop.f32.mrf.mxu0
      %v516 = vadd.f32 %v319, %v515
      %v517 = vpop.f32.mrf.mxu0
      %v518 = vadd.f32 %v319, %v517
      %519 = vmatmul.bf16.gmra.mxu0 %v442
      %v520 = vpop.f32.mrf.mxu0
      %v521 = vadd.f32 %v319, %v520
      %v522 = vpop.f32.mrf.mxu0
      %v523 = vadd.f32 %v319, %v522
      %524 = vmatmul.bf16.gmra.mxu0 %v445
      %v525 = vpop.f32.mrf.mxu0
      %v526 = vadd.f32 %v319, %v525
      %v527 = vpop.f32.mrf.mxu0
      %v528 = vadd.f32 %v319, %v527
      %529 = vmatmul.bf16.gmra.mxu0 %v448
      %v530 = vpop.f32.mrf.mxu0
      %v531 = vadd.f32 %v319, %v530
      %v532 = vpop.f32.mrf.mxu0
      %v533 = vadd.f32 %v319, %v532
      %534 = vmatmul.bf16.gmra.mxu0 %v451
      %v535 = vpop.f32.mrf.mxu0
      %v536 = vadd.f32 %v319, %v535
      %v537 = vpop.f32.mrf.mxu0
      %v538 = vadd.f32 %v319, %v537
      %539 = vmatmul.bf16.gmra.mxu0 %v454
      %v540 = vpop.f32.mrf.mxu0
      %v541 = vadd.f32 %v319, %v540
      %v542 = vpop.f32.mrf.mxu0
      %v543 = vadd.f32 %v319, %v542
      %544 = vdwg.mxu0
      %v545 = vtanh.pop %v466
      %v546 = vtanh.pop %v468
      %v547 = vtanh.pop %v471
      %v548 = vtanh.pop %v473
      %v549 = vtanh.pop %v476
      %v550 = vtanh.pop %v478
      %v551 = vtanh.pop %v481
      %v552 = vtanh.pop %v483
      %v553 = vtanh.pop %v486
      %v554 = vtanh.pop %v488
      %v555 = vtanh.pop %v491
      %v556 = vtanh.pop %v493
      %v557 = vtanh.pop %v496
      %v558 = vtanh.pop %v498
      %v559 = vtanh.pop %v501
      %v560 = vtanh.pop %v503
      %v561 = vtanh.pop %v506
      %v562 = vtanh.pop %v508
      %v563 = vtanh.pop %v511
      %v564 = vtanh.pop %v513
      %v565 = vtanh.pop %v516
      %v566 = vtanh.pop %v518
      %v567 = vtanh.pop %v521
      %v568 = vtanh.pop %v523
      %v569 = vtanh.pop %v526
      %v570 = vtanh.pop %v528
      %v571 = vtanh.pop %v531
      %v572 = vtanh.pop %v533
      %v573 = vtanh.pop %v536
      %v574 = vtanh.pop %v538
      %v575 = vtanh.pop %v541
      %v576 = vtanh.pop %v543
      %v577 = vpack.c.bf16 %v546, %v545
      %v578 = vpack.c.bf16 %v548, %v547
      %v579 = vpack.c.bf16 %v550, %v549
      %v580 = vpack.c.bf16 %v552, %v551
      %v581 = vpack.c.bf16 %v554, %v553
      %v582 = vpack.c.bf16 %v556, %v555
      %v583 = vpack.c.bf16 %v558, %v557
      %v584 = vpack.c.bf16 %v560, %v559
      %v585 = vpack.c.bf16 %v562, %v561
      %v586 = vpack.c.bf16 %v564, %v563
      %v587 = vpack.c.bf16 %v566, %v565
      %v588 = vpack.c.bf16 %v568, %v567
      %v589 = vpack.c.bf16 %v570, %v569
      %v590 = vpack.c.bf16 %v572, %v571
      %v591 = vpack.c.bf16 %v574, %v573
      %v592 = vpack.c.bf16 %v576, %v575
      %v593 = vld [vmem:[%s3] sm:$0xf]
      %v594 = vld [vmem:[%s3 + $0x4] sm:$0xf]
      %v595 = vld [vmem:[%s3 + $0x8] sm:$0xf]
      %v596 = vld [vmem:[%s3 + $0xc] sm:$0xf]
      %v597 = vld [vmem:[%s3 + $0x10] sm:$0xf]
      %v598 = vld [vmem:[%s3 + $0x14] sm:$0xf]
      %v599 = vld [vmem:[%s3 + $0x18] sm:$0xf]
      %v600 = vld [vmem:[%s3 + $0x1c] sm:$0xf]
      %v601 = vld [vmem:[%s3 + $0x20] sm:$0xf]
      %v602 = vld [vmem:[%s3 + $0x24] sm:$0xf]
      %v603 = vld [vmem:[%s3 + $0x28] sm:$0xf]
      %v604 = vld [vmem:[%s3 + $0x2c] sm:$0xf]
      %v605 = vld [vmem:[%s3 + $0x30] sm:$0xf]
      %v606 = vld [vmem:[%s3 + $0x34] sm:$0xf]
      %v607 = vld [vmem:[%s3 + $0x38] sm:$0xf]
      %v608 = vld [vmem:[%s3 + $0x3c] sm:$0xf]
      %v609 = vld [vmem:[%s4] sm:$0x1]
      %v611 = vperm.slane %v609, 0
      %v629 = vunpack.c.l.b16 %v593
      %v630 = vunpack.c.l.b16 %v594
      %v631 = vunpack.c.l.b16 %v595
      %v632 = vunpack.c.l.b16 %v596
      %v633 = vunpack.c.l.b16 %v597
      %v634 = vunpack.c.l.b16 %v598
      %v635 = vunpack.c.l.b16 %v599
      %v636 = vunpack.c.l.b16 %v600
      %v637 = vunpack.c.l.b16 %v601
      %v638 = vunpack.c.l.b16 %v602
      %v639 = vunpack.c.l.b16 %v603
      %v640 = vunpack.c.l.b16 %v604
      %v641 = vunpack.c.l.b16 %v605
      %v642 = vunpack.c.l.b16 %v606
      %v643 = vunpack.c.l.b16 %v607
      %v644 = vunpack.c.l.b16 %v608
      %v645 = vpack.c.b16 %v630, %v629
      %v646 = vpack.c.b16 %v632, %v631
      %v647 = vpack.c.b16 %v634, %v633
      %v648 = vpack.c.b16 %v636, %v635
      %v649 = vpack.c.b16 %v638, %v637
      %v650 = vpack.c.b16 %v640, %v639
      %v651 = vpack.c.b16 %v642, %v641
      %v652 = vpack.c.b16 %v644, %v643
      %661 = vmatpush.bf16.msra.mxu0 %v652
      %662 = vmatpush.bf16.msra.mxu0 %v651
      %663 = vmatpush.bf16.msra.mxu0 %v650
      %664 = vmatpush.bf16.msra.mxu0 %v649
      %665 = vmatpush.bf16.msra.mxu0 %v648
      %666 = vmatpush.bf16.msra.mxu0 %v647
      %667 = vmatpush.bf16.msra.mxu0 %v646
      %668 = vmatpush.bf16.msra.mxu0 %v645
      %669 = vmatmul.bf16.gmra.mxu0 %v577
      %v670 = vpop.f32.mrf.mxu0
      %v671 = vadd.f32 %v611, %v670
      %v672 = vpop.f32.mrf.mxu0
      %v673 = vadd.f32 %v611, %v672
      %674 = vmatmul.bf16.gmra.mxu0 %v578
      %v675 = vpop.f32.mrf.mxu0
      %v676 = vadd.f32 %v611, %v675
      %v677 = vpop.f32.mrf.mxu0
      %v678 = vadd.f32 %v611, %v677
      %679 = vmatmul.bf16.gmra.mxu0 %v579
      %v680 = vpop.f32.mrf.mxu0
      %v681 = vadd.f32 %v611, %v680
      %v682 = vpop.f32.mrf.mxu0
      %v683 = vadd.f32 %v611, %v682
      %684 = vmatmul.bf16.gmra.mxu0 %v580
      %v685 = vpop.f32.mrf.mxu0
      %v686 = vadd.f32 %v611, %v685
      %v687 = vpop.f32.mrf.mxu0
      %v688 = vadd.f32 %v611, %v687
      %689 = vmatmul.bf16.gmra.mxu0 %v581
      %v690 = vpop.f32.mrf.mxu0
      %v691 = vadd.f32 %v611, %v690
      %v692 = vpop.f32.mrf.mxu0
      %v693 = vadd.f32 %v611, %v692
      %694 = vmatmul.bf16.gmra.mxu0 %v582
      %v695 = vpop.f32.mrf.mxu0
      %v696 = vadd.f32 %v611, %v695
      %v697 = vpop.f32.mrf.mxu0
      %v698 = vadd.f32 %v611, %v697
      %699 = vmatmul.bf16.gmra.mxu0 %v583
      %v700 = vpop.f32.mrf.mxu0
      %v701 = vadd.f32 %v611, %v700
      %v702 = vpop.f32.mrf.mxu0
      %v703 = vadd.f32 %v611, %v702
      %704 = vmatmul.bf16.gmra.mxu0 %v584
      %v705 = vpop.f32.mrf.mxu0
      %v706 = vadd.f32 %v611, %v705
      %v707 = vpop.f32.mrf.mxu0
      %v708 = vadd.f32 %v611, %v707
      %709 = vmatmul.bf16.gmra.mxu0 %v585
      %v710 = vpop.f32.mrf.mxu0
      %v711 = vadd.f32 %v611, %v710
      %v712 = vpop.f32.mrf.mxu0
      %v713 = vadd.f32 %v611, %v712
      %714 = vmatmul.bf16.gmra.mxu0 %v586
      %v715 = vpop.f32.mrf.mxu0
      %v716 = vadd.f32 %v611, %v715
      %v717 = vpop.f32.mrf.mxu0
      %v718 = vadd.f32 %v611, %v717
      %719 = vmatmul.bf16.gmra.mxu0 %v587
      %v720 = vpop.f32.mrf.mxu0
      %v721 = vadd.f32 %v611, %v720
      %v722 = vpop.f32.mrf.mxu0
      %v723 = vadd.f32 %v611, %v722
      %724 = vmatmul.bf16.gmra.mxu0 %v588
      %v725 = vpop.f32.mrf.mxu0
      %v726 = vadd.f32 %v611, %v725
      %v727 = vpop.f32.mrf.mxu0
      %v728 = vadd.f32 %v611, %v727
      %729 = vmatmul.bf16.gmra.mxu0 %v589
      %v730 = vpop.f32.mrf.mxu0
      %v731 = vadd.f32 %v611, %v730
      %v732 = vpop.f32.mrf.mxu0
      %v733 = vadd.f32 %v611, %v732
      %734 = vmatmul.bf16.gmra.mxu0 %v590
      %v735 = vpop.f32.mrf.mxu0
      %v736 = vadd.f32 %v611, %v735
      %v737 = vpop.f32.mrf.mxu0
      %v738 = vadd.f32 %v611, %v737
      %739 = vmatmul.bf16.gmra.mxu0 %v591
      %v740 = vpop.f32.mrf.mxu0
      %v741 = vadd.f32 %v611, %v740
      %v742 = vpop.f32.mrf.mxu0
      %v743 = vadd.f32 %v611, %v742
      %744 = vmatmul.bf16.gmra.mxu0 %v592
      %v745 = vpop.f32.mrf.mxu0
      %v746 = vadd.f32 %v611, %v745
      %v747 = vpop.f32.mrf.mxu0
      %v748 = vadd.f32 %v611, %v747
      %749 = vdwg.mxu0
      %v750 = vtanh.pop %v671
      %v751 = vtanh.pop %v673
      %v752 = vtanh.pop %v676
      %v753 = vtanh.pop %v678
      %v754 = vtanh.pop %v681
      %v755 = vtanh.pop %v683
      %v756 = vtanh.pop %v686
      %v757 = vtanh.pop %v688
      %v758 = vtanh.pop %v691
      %v759 = vtanh.pop %v693
      %v760 = vtanh.pop %v696
      %v761 = vtanh.pop %v698
      %v762 = vtanh.pop %v701
      %v763 = vtanh.pop %v703
      %v764 = vtanh.pop %v706
      %v765 = vtanh.pop %v708
      %v766 = vtanh.pop %v711
      %v767 = vtanh.pop %v713
      %v768 = vtanh.pop %v716
      %v769 = vtanh.pop %v718
      %v770 = vtanh.pop %v721
      %v771 = vtanh.pop %v723
      %v772 = vtanh.pop %v726
      %v773 = vtanh.pop %v728
      %v774 = vtanh.pop %v731
      %v775 = vtanh.pop %v733
      %v776 = vtanh.pop %v736
      %v777 = vtanh.pop %v738
      %v778 = vtanh.pop %v741
      %v779 = vtanh.pop %v743
      %v780 = vtanh.pop %v746
      %v781 = vtanh.pop %v748
      %v782 = vpack.c.bf16 %v751, %v750
      %v783 = vpack.c.bf16 %v753, %v752
      %v784 = vpack.c.bf16 %v755, %v754
      %v785 = vpack.c.bf16 %v757, %v756
      %v786 = vpack.c.bf16 %v759, %v758
      %v787 = vpack.c.bf16 %v761, %v760
      %v788 = vpack.c.bf16 %v763, %v762
      %v789 = vpack.c.bf16 %v765, %v764
      %v790 = vpack.c.bf16 %v767, %v766
      %v791 = vpack.c.bf16 %v769, %v768
      %v792 = vpack.c.bf16 %v771, %v770
      %v793 = vpack.c.bf16 %v773, %v772
      %v794 = vpack.c.bf16 %v775, %v774
      %v795 = vpack.c.bf16 %v777, %v776
      %v796 = vpack.c.bf16 %v779, %v778
      %v797 = vpack.c.bf16 %v781, %v780
      %v798 = vld [vmem:[%s5] sm:$0xf]
      %v799 = vld [vmem:[%s5 + $0x4] sm:$0xf]
      %v800 = vld [vmem:[%s5 + $0x8] sm:$0xf]
      %v801 = vld [vmem:[%s5 + $0xc] sm:$0xf]
      %v802 = vld [vmem:[%s5 + $0x10] sm:$0xf]
      %v803 = vld [vmem:[%s5 + $0x14] sm:$0xf]
      %v804 = vld [vmem:[%s5 + $0x18] sm:$0xf]
      %v805 = vld [vmem:[%s5 + $0x1c] sm:$0xf]
      %v806 = vld [vmem:[%s5 + $0x20] sm:$0xf]
      %v807 = vld [vmem:[%s5 + $0x24] sm:$0xf]
      %v808 = vld [vmem:[%s5 + $0x28] sm:$0xf]
      %v809 = vld [vmem:[%s5 + $0x2c] sm:$0xf]
      %v810 = vld [vmem:[%s5 + $0x30] sm:$0xf]
      %v811 = vld [vmem:[%s5 + $0x34] sm:$0xf]
      %v812 = vld [vmem:[%s5 + $0x38] sm:$0xf]
      %v813 = vld [vmem:[%s5 + $0x3c] sm:$0xf]
      %v814 = vld [vmem:[%s6] sm:$0x1]
      %v816 = vperm.slane %v814, 0
      %v834 = vunpack.c.l.b16 %v798
      %v835 = vunpack.c.l.b16 %v799
      %v836 = vunpack.c.l.b16 %v800
      %v837 = vunpack.c.l.b16 %v801
      %v838 = vunpack.c.l.b16 %v802
      %v839 = vunpack.c.l.b16 %v803
      %v840 = vunpack.c.l.b16 %v804
      %v841 = vunpack.c.l.b16 %v805
      %v842 = vunpack.c.l.b16 %v806
      %v843 = vunpack.c.l.b16 %v807
      %v844 = vunpack.c.l.b16 %v808
      %v845 = vunpack.c.l.b16 %v809
      %v846 = vunpack.c.l.b16 %v810
      %v847 = vunpack.c.l.b16 %v811
      %v848 = vunpack.c.l.b16 %v812
      %v849 = vunpack.c.l.b16 %v813
      %v850 = vpack.c.b16 %v835, %v834
      %v851 = vpack.c.b16 %v837, %v836
      %v852 = vpack.c.b16 %v839, %v838
      %v853 = vpack.c.b16 %v841, %v840
      %v854 = vpack.c.b16 %v843, %v842
      %v855 = vpack.c.b16 %v845, %v844
      %v856 = vpack.c.b16 %v847, %v846
      %v857 = vpack.c.b16 %v849, %v848
      %866 = vmatpush.bf16.msra.mxu0 %v857
      %867 = vmatpush.bf16.msra.mxu0 %v856
      %868 = vmatpush.bf16.msra.mxu0 %v855
      %869 = vmatpush.bf16.msra.mxu0 %v854
      %870 = vmatpush.bf16.msra.mxu0 %v853
      %871 = vmatpush.bf16.msra.mxu0 %v852
      %872 = vmatpush.bf16.msra.mxu0 %v851
      %873 = vmatpush.bf16.msra.mxu0 %v850
      %874 = vmatmul.bf16.gmra.mxu0 %v782
      %v875 = vpop.f32.mrf.mxu0
      %v876 = vadd.f32 %v816, %v875
      %v877 = vpop.f32.mrf.mxu0
      %v878 = vadd.f32 %v816, %v877
      %879 = vmatmul.bf16.gmra.mxu0 %v783
      %v880 = vpop.f32.mrf.mxu0
      %v881 = vadd.f32 %v816, %v880
      %v882 = vpop.f32.mrf.mxu0
      %v883 = vadd.f32 %v816, %v882
      %884 = vmatmul.bf16.gmra.mxu0 %v784
      %v885 = vpop.f32.mrf.mxu0
      %v886 = vadd.f32 %v816, %v885
      %v887 = vpop.f32.mrf.mxu0
      %v888 = vadd.f32 %v816, %v887
      %889 = vmatmul.bf16.gmra.mxu0 %v785
      %v890 = vpop.f32.mrf.mxu0
      %v891 = vadd.f32 %v816, %v890
      %v892 = vpop.f32.mrf.mxu0
      %v893 = vadd.f32 %v816, %v892
      %894 = vmatmul.bf16.gmra.mxu0 %v786
      %v895 = vpop.f32.mrf.mxu0
      %v896 = vadd.f32 %v816, %v895
      %v897 = vpop.f32.mrf.mxu0
      %v898 = vadd.f32 %v816, %v897
      %899 = vmatmul.bf16.gmra.mxu0 %v787
      %v900 = vpop.f32.mrf.mxu0
      %v901 = vadd.f32 %v816, %v900
      %v902 = vpop.f32.mrf.mxu0
      %v903 = vadd.f32 %v816, %v902
      %904 = vmatmul.bf16.gmra.mxu0 %v788
      %v905 = vpop.f32.mrf.mxu0
      %v906 = vadd.f32 %v816, %v905
      %v907 = vpop.f32.mrf.mxu0
      %v908 = vadd.f32 %v816, %v907
      %909 = vmatmul.bf16.gmra.mxu0 %v789
      %v910 = vpop.f32.mrf.mxu0
      %v911 = vadd.f32 %v816, %v910
      %v912 = vpop.f32.mrf.mxu0
      %v913 = vadd.f32 %v816, %v912
      %914 = vmatmul.bf16.gmra.mxu0 %v790
      %v915 = vpop.f32.mrf.mxu0
      %v916 = vadd.f32 %v816, %v915
      %v917 = vpop.f32.mrf.mxu0
      %v918 = vadd.f32 %v816, %v917
      %919 = vmatmul.bf16.gmra.mxu0 %v791
      %v920 = vpop.f32.mrf.mxu0
      %v921 = vadd.f32 %v816, %v920
      %v922 = vpop.f32.mrf.mxu0
      %v923 = vadd.f32 %v816, %v922
      %924 = vmatmul.bf16.gmra.mxu0 %v792
      %v925 = vpop.f32.mrf.mxu0
      %v926 = vadd.f32 %v816, %v925
      %v927 = vpop.f32.mrf.mxu0
      %v928 = vadd.f32 %v816, %v927
      %929 = vmatmul.bf16.gmra.mxu0 %v793
      %v930 = vpop.f32.mrf.mxu0
      %v931 = vadd.f32 %v816, %v930
      %v932 = vpop.f32.mrf.mxu0
      %v933 = vadd.f32 %v816, %v932
      %934 = vmatmul.bf16.gmra.mxu0 %v794
      %v935 = vpop.f32.mrf.mxu0
      %v936 = vadd.f32 %v816, %v935
      %v937 = vpop.f32.mrf.mxu0
      %v938 = vadd.f32 %v816, %v937
      %939 = vmatmul.bf16.gmra.mxu0 %v795
      %v940 = vpop.f32.mrf.mxu0
      %v941 = vadd.f32 %v816, %v940
      %v942 = vpop.f32.mrf.mxu0
      %v943 = vadd.f32 %v816, %v942
      %944 = vmatmul.bf16.gmra.mxu0 %v796
      %v945 = vpop.f32.mrf.mxu0
      %v946 = vadd.f32 %v816, %v945
      %v947 = vpop.f32.mrf.mxu0
      %v948 = vadd.f32 %v816, %v947
      %949 = vmatmul.bf16.gmra.mxu0 %v797
      %v950 = vpop.f32.mrf.mxu0
      %v951 = vadd.f32 %v816, %v950
      %v952 = vpop.f32.mrf.mxu0
      %v953 = vadd.f32 %v816, %v952
      %954 = vdwg.mxu0
      %955 = vst [vmem:[%s280] sm:$0xff] %v876
      %956 = vst [vmem:[%s280 + $0x8] sm:$0xff] %v878
      %957 = vst [vmem:[%s280 + $0x10] sm:$0xff] %v881
      %958 = vst [vmem:[%s280 + $0x18] sm:$0xff] %v883
      %959 = vst [vmem:[%s280 + $0x20] sm:$0xff] %v886
      %960 = vst [vmem:[%s280 + $0x28] sm:$0xff] %v888
      %961 = vst [vmem:[%s280 + $0x30] sm:$0xff] %v891
      %962 = vst [vmem:[%s280 + $0x38] sm:$0xff] %v893
      %963 = vst [vmem:[%s280 + $0x40] sm:$0xff] %v896
      %964 = vst [vmem:[%s280 + $0x48] sm:$0xff] %v898
      %965 = vst [vmem:[%s280 + $0x50] sm:$0xff] %v901
      %966 = vst [vmem:[%s280 + $0x58] sm:$0xff] %v903
      %967 = vst [vmem:[%s280 + $0x60] sm:$0xff] %v906
      %968 = vst [vmem:[%s280 + $0x68] sm:$0xff] %v908
      %969 = vst [vmem:[%s280 + $0x70] sm:$0xff] %v911
      %970 = vst [vmem:[%s280 + $0x78] sm:$0xff] %v913
      %971 = vst [vmem:[%s280 + $0x80] sm:$0xff] %v916
      %972 = vst [vmem:[%s280 + $0x88] sm:$0xff] %v918
      %973 = vst [vmem:[%s280 + $0x90] sm:$0xff] %v921
      %974 = vst [vmem:[%s280 + $0x98] sm:$0xff] %v923
      %975 = vst [vmem:[%s280 + $0xa0] sm:$0xff] %v926
      %976 = vst [vmem:[%s280 + $0xa8] sm:$0xff] %v928
      %977 = vst [vmem:[%s280 + $0xb0] sm:$0xff] %v931
      %978 = vst [vmem:[%s280 + $0xb8] sm:$0xff] %v933
      %979 = vst [vmem:[%s280 + $0xc0] sm:$0xff] %v936
      %980 = vst [vmem:[%s280 + $0xc8] sm:$0xff] %v938
      %981 = vst [vmem:[%s280 + $0xd0] sm:$0xff] %v941
      %982 = vst [vmem:[%s280 + $0xd8] sm:$0xff] %v943
      %983 = vst [vmem:[%s280 + $0xe0] sm:$0xff] %v946
      %984 = vst [vmem:[%s280 + $0xe8] sm:$0xff] %v948
      %985 = vst [vmem:[%s280 + $0xf0] sm:$0xff] %v951
      %986 = vst [vmem:[%s280 + $0xf8] sm:$0xff] %v953
      %s987 = smul.u32 32, %s18
      %p988 = scmp.lt.s32.totalorder %s987, 63
      %s989 = scalar_select %p988, %s987, 63
      %s990 = smul.addr %s989, 8
      %s991 = scalar_lea.vmem %s7, %s990
      // Predicated region
      $region49: #{feedforward_apply.1} parent=47 // pred_check
        %p992 = pneg %p188
      $region50: #{feedforward_apply.1} parent=47 // pred_check_branch
        %994 = sbr.rel (%p992) target = $region52
      $region51: #{feedforward_apply.1} parent=47 // pred_region
        %s995 = smul.u32 32, %s18
      $region52: #{feedforward_apply.1} parent=47 // pred_fallthru
        _
    $region48: #{feedforward_apply.1} parent=5 // pred_fallthru
      _
    %p996 = scmp.le.s32.totalorder 2, %s13
    // Predicated region
    $region53: #{feedforward_apply.1} parent=5 // pred_check
      %p997 = pneg %p996
    $region54: #{feedforward_apply.1} parent=5 // pred_check_branch
      %999 = sbr.rel (%p997) target = $region56
    $region55: #{feedforward_apply.1} parent=5 // pred_region
      %s1000 = ssub.s32 %s13, 2
      // Predicated region
      $region57: #{feedforward_apply.1} parent=55 // pred_check
        %p1001 = pneg %p194
      $region58: #{feedforward_apply.1} parent=55 // pred_check_branch
        %1003 = sbr.rel (%p1001) target = $region60
      $region59: #{feedforward_apply.1} parent=55 // pred_region
        %s1004 = smul.u32 32, %s19
        %p1005 = scmp.lt.s32.totalorder %s1004, 63
        %s1006 = scalar_select %p1005, %s1004, 63
        %s1007 = smul.addr %s1006, 8
        %s1008 = scalar_lea.vmem %s7, %s1007
      $region60: #{feedforward_apply.1} parent=55 // pred_fallthru
        _
    $region56: #{feedforward_apply.1} parent=5 // pred_fallthru
      _
  $region6: #{feedforward_apply.1} parent=0 // loop_footer
    %s17 = sadd.s32 1, %s13
  $region7: #{feedforward_apply.1} parent=0 // loop_footer_branch
    %12 = sbr.rel target = $region3
  $region8: #{feedforward_apply.1} parent=0 // loop_exit
    _

</llo_original>
